<compile_context>
chip_gen: v6e
topology: v6e:2x2x1
jax: 0.10.0
libtpu: 0.0.40
codegen_flags: <defaults>
</compile_context>

<pallas_src>
import functools

import jax
import jax.numpy as jnp
import numpy as np
from jax.experimental import pallas as pl
from jax.experimental.pallas import tpu as pltpu

HIDDEN = 128          # fc1 output width (already a lane multiple)
LANE = 128            # TPU lane width
MAX_BLOCK_B = 256     # batch-tile rows per grid step


def _round_up(x, m):
    return ((x + m - 1) // m) * m


def reinforce_kernel(x_ref, w1_ref, b1_ref, w2_ref, b2_ref, o_ref, *, n_actions):
    # x_ref: [TB, K_pad] bf16, weights bf16, biases f32, output f32.
    x = x_ref[...]

    # fc1 (MXU, f32 accumulate) + ReLU in f32.
    h = jnp.dot(x, w1_ref[...], preferred_element_type=jnp.float32) + b1_ref[...]
    h = jnp.maximum(h, 0.0)

    # fc2 (MXU): feed bf16 activations, accumulate f32.
    logits = jnp.dot(h.astype(jnp.bfloat16), w2_ref[...],
                     preferred_element_type=jnp.float32) + b2_ref[...]

    # Mask padded action columns so the softmax only covers real actions.
    col = jax.lax.broadcasted_iota(jnp.int32, logits.shape, 1)
    logits = jnp.where(col < n_actions, logits, -1e30)

    # Numerically-stable softmax along the action (lane) axis, in f32.
    m = jnp.max(logits, axis=-1, keepdims=True)
    e = jnp.exp(logits - m)
    s = jnp.sum(e, axis=-1, keepdims=True)
    o_ref[...] = e / s


def init_reinforce_params(key, input_size, n_actions):
    """Mirror nn.Linear default init (U(-1/sqrt(fan_in), 1/sqrt(fan_in))),
    then transpose to [in, out], zero-pad to lane multiples, cast weights bf16."""
    k1, k2, k3, k4 = jax.random.split(key, 4)

    def uni(k, shape, bound):
        return jax.random.uniform(k, shape, jnp.float32, -bound, bound)

    bnd1 = 1.0 / np.sqrt(input_size)
    w1 = uni(k1, (HIDDEN, input_size), bnd1)        # torch layout (out, in)
    b1 = uni(k2, (HIDDEN,), bnd1)
    bnd2 = 1.0 / np.sqrt(HIDDEN)
    w2 = uni(k3, (n_actions, HIDDEN), bnd2)
    b2 = uni(k4, (n_actions,), bnd2)

    k_pad = _round_up(input_size, LANE)
    n_pad = _round_up(n_actions, LANE)

    w1_p = (jnp.zeros((k_pad, HIDDEN), jnp.float32)
            .at[:input_size, :].set(w1.T)).astype(jnp.bfloat16)
    b1_p = b1.reshape(1, HIDDEN).astype(jnp.float32)
    w2_p = (jnp.zeros((HIDDEN, n_pad), jnp.float32)
            .at[:, :n_actions].set(w2.T)).astype(jnp.bfloat16)
    b2_p = (jnp.zeros((1, n_pad), jnp.float32)
            .at[0, :n_actions].set(b2))
    return dict(w1=w1_p, b1=b1_p, w2=w2_p, b2=b2_p)


def reinforce_forward(x, params, n_actions):
    """x: [B, input_size] float. Returns softmax probs [B, n_actions] f32."""
    B, n_in = x.shape
    k_pad = params["w1"].shape[0]
    n_pad = params["w2"].shape[1]

    # Batch tile: at least 8 sublanes, at most MAX_BLOCK_B rows per grid step.
    tb = min(MAX_BLOCK_B, _round_up(max(B, 8), 8))
    b_pad = _round_up(B, tb)

    # Lane-align the input features and pad the batch (zeros are harmless:
    # padded rows are sliced away, padded feature columns hit zero weight rows).
    x_p = (jnp.zeros((b_pad, k_pad), jnp.bfloat16)
           .at[:B, :n_in].set(x.astype(jnp.bfloat16)))

    kernel = functools.partial(reinforce_kernel, n_actions=n_actions)

    out = pl.pallas_call(
        kernel,
        out_shape=jax.ShapeDtypeStruct((b_pad, n_pad), jnp.float32),
        grid_spec=pltpu.PrefetchScalarGridSpec(
            num_scalar_prefetch=0,
            grid=(b_pad // tb,),
            in_specs=[
                pl.BlockSpec((tb, k_pad), lambda i: (i, 0)),      # x tile
                pl.BlockSpec((k_pad, HIDDEN), lambda i: (0, 0)),  # w1 (resident)
                pl.BlockSpec((1, HIDDEN), lambda i: (0, 0)),      # b1
                pl.BlockSpec((HIDDEN, n_pad), lambda i: (0, 0)),  # w2 (resident)
                pl.BlockSpec((1, n_pad), lambda i: (0, 0)),       # b2
            ],
            out_specs=pl.BlockSpec((tb, n_pad), lambda i: (i, 0)),
        ),
        compiler_params=pltpu.CompilerParams(
            dimension_semantics=("parallel",)),
    )(x_p, params["w1"], params["b1"], params["w2"], params["b2"])

    return out[:B, :n_actions]


def reinforce_reference(x, params, n_actions):
    """Pure-JAX reference mirroring the kernel's dtype path (bf16 MXU inputs,
    f32 accumulation / activations / softmax)."""
    B, n_in = x.shape
    k_pad = params["w1"].shape[0]
    x_p = (jnp.zeros((B, k_pad), jnp.float32)
           .at[:, :n_in].set(x.astype(jnp.bfloat16).astype(jnp.float32)))
    w1 = params["w1"].astype(jnp.float32)
    w2 = params["w2"].astype(jnp.float32)
    h = jnp.maximum(x_p @ w1 + params["b1"], 0.0)
    logits = h.astype(jnp.bfloat16).astype(jnp.float32) @ w2 + params["b2"]
    logits = logits[:, :n_actions]
    return jax.nn.softmax(logits, axis=-1)


if __name__ == "__main__":
    key = jax.random.PRNGKey(0)
    k_x, k_p = jax.random.split(key)

    batch, input_size, n_actions = 2, 8, 4
    x = jax.random.normal(k_x, (batch, input_size), jnp.float32)
    params = init_reinforce_params(k_p, input_size, n_actions)

    out = jax.block_until_ready(reinforce_forward(x, params, n_actions))
    ref = reinforce_reference(x, params, n_actions)

    np.testing.assert_allclose(np.asarray(out), np.asarray(ref),
                               rtol=1e-3, atol=1e-5)
    np.testing.assert_allclose(np.asarray(out).sum(-1), np.ones(batch),
                               rtol=1e-4, atol=1e-5)
    assert out.shape == (batch, n_actions)
    print("KERNEL_OK")
</pallas_src>

<mosaic_0001>
module attributes {stable_mosaic.version = 11 : i64} {
  func.func @reinforce_kernel(%arg0: i32, %arg1: memref<8x128xbf16, #tpu.memory_space<vmem>>, %arg2: memref<128x128xbf16, #tpu.memory_space<vmem>>, %arg3: memref<1x128xf32, #tpu.memory_space<vmem>>, %arg4: memref<128x128xbf16, #tpu.memory_space<vmem>>, %arg5: memref<1x128xf32, #tpu.memory_space<vmem>>, %arg6: memref<8x128xf32, #tpu.memory_space<vmem>>) attributes {dimension_semantics = [#tpu.dimension_semantics<parallel>], iteration_bounds = array<i64: 1>, scalar_prefetch = 0 : i64, scratch_operands = 0 : i64, tpu.core_type = #tpu.core_type<tc>, window_params = [{transform_indices = @transform_0, window_bounds = array<i64: 8, 128>}, {pipeline_mode = #tpu.pipeline_mode<synchronous>, transform_indices = @transform_1, window_bounds = array<i64: 128, 128>}, {pipeline_mode = #tpu.pipeline_mode<synchronous>, transform_indices = @transform_2, window_bounds = array<i64: 1, 128>}, {pipeline_mode = #tpu.pipeline_mode<synchronous>, transform_indices = @transform_3, window_bounds = array<i64: 128, 128>}, {pipeline_mode = #tpu.pipeline_mode<synchronous>, transform_indices = @transform_4, window_bounds = array<i64: 1, 128>}, {transform_indices = @transform_5, window_bounds = array<i64: 8, 128>}]} {
    %c0 = arith.constant 0 : index
    %c0_0 = arith.constant 0 : index
    %0 = vector.load %arg1[%c0, %c0_0] : memref<8x128xbf16, #tpu.memory_space<vmem>>, vector<8x128xbf16>
    %c0_1 = arith.constant 0 : index
    %c0_2 = arith.constant 0 : index
    %1 = vector.load %arg2[%c0_1, %c0_2] : memref<128x128xbf16, #tpu.memory_space<vmem>>, vector<128x128xbf16>
    %cst = arith.constant dense<0.000000e+00> : vector<8x128xf32>
    %2 = tpu.matmul %0, %1, %cst {dimension_numbers = #tpu.dot_dimension_numbers<[1], [0], [0], [1], [0, 0, 1, 1], [], []>} : vector<8x128xbf16>, vector<128x128xbf16>, vector<8x128xf32> -> vector<8x128xf32>
    %c0_3 = arith.constant 0 : index
    %c0_4 = arith.constant 0 : index
    %3 = vector.load %arg3[%c0_3, %c0_4] : memref<1x128xf32, #tpu.memory_space<vmem>>, vector<1x128xf32>
    %4 = vector.broadcast %3 : vector<1x128xf32> to vector<8x128xf32>
    %5 = arith.addf %2, %4 : vector<8x128xf32>
    %cst_5 = arith.constant 0.000000e+00 : f32
    %6 = vector.broadcast %cst_5 : f32 to vector<8x128xf32>
    %7 = arith.maximumf %5, %6 : vector<8x128xf32>
    %8 = arith.truncf %7 : vector<8x128xf32> to vector<8x128xbf16>
    %c0_6 = arith.constant 0 : index
    %c0_7 = arith.constant 0 : index
    %9 = vector.load %arg4[%c0_6, %c0_7] : memref<128x128xbf16, #tpu.memory_space<vmem>>, vector<128x128xbf16>
    %cst_8 = arith.constant dense<0.000000e+00> : vector<8x128xf32>
    %10 = tpu.matmul %8, %9, %cst_8 {dimension_numbers = #tpu.dot_dimension_numbers<[1], [0], [0], [1], [0, 0, 1, 1], [], []>} : vector<8x128xbf16>, vector<128x128xbf16>, vector<8x128xf32> -> vector<8x128xf32>
    %c0_9 = arith.constant 0 : index
    %c0_10 = arith.constant 0 : index
    %11 = vector.load %arg5[%c0_9, %c0_10] : memref<1x128xf32, #tpu.memory_space<vmem>>, vector<1x128xf32>
    %12 = vector.broadcast %11 : vector<1x128xf32> to vector<8x128xf32>
    %13 = arith.addf %10, %12 : vector<8x128xf32>
    %14 = tpu.iota {dimensions = array<i32: 1>} : vector<8x128xi32>
    %c4_i32 = arith.constant 4 : i32
    %15 = vector.broadcast %c4_i32 : i32 to vector<8x128xi32>
    %16 = arith.cmpi slt, %14, %15 : vector<8x128xi32>
    %cst_11 = arith.constant -1.000000e+30 : f32
    %17 = vector.broadcast %cst_11 : f32 to vector<8x128xf32>
    %18 = arith.select %16, %13, %17 : vector<8x128xi1>, vector<8x128xf32>
    %cst_12 = arith.constant dense<0xFF800000> : vector<8xf32>
    %19 = vector.multi_reduction <maximumf>, %18, %cst_12 [1] : vector<8x128xf32> to vector<8xf32>
    %20 = vector.shape_cast %19 : vector<8xf32> to vector<8x1xf32>
    %21 = vector.broadcast %20 : vector<8x1xf32> to vector<8x128xf32>
    %22 = arith.subf %18, %21 : vector<8x128xf32>
    %23 = math.exp %22 : vector<8x128xf32>
    %cst_13 = arith.constant dense<0.000000e+00> : vector<8xf32>
    %24 = vector.multi_reduction <add>, %23, %cst_13 [1] : vector<8x128xf32> to vector<8xf32>
    %25 = vector.shape_cast %24 : vector<8xf32> to vector<8x1xf32>
    %26 = vector.broadcast %25 : vector<8x1xf32> to vector<8x128xf32>
    %27 = arith.divf %23, %26 : vector<8x128xf32>
    %c0_14 = arith.constant 0 : index
    %c0_15 = arith.constant 0 : index
    %28 = vector.load %arg6[%c0_14, %c0_15] : memref<8x128xf32, #tpu.memory_space<vmem>>, vector<8x128xf32>
    tpu.vector_store %arg6[%c0_14, %c0_15], %27 {strides = array<i32>} : memref<8x128xf32, #tpu.memory_space<vmem>>, vector<8x128xf32>,
    return
  }
  func.func @transform_0(%arg0: i32) -> (i32, i32) {
    %c0_i32 = arith.constant 0 : i32
    %c0_i32_0 = arith.constant 0 : i32
    return %arg0, %c0_i32 : i32, i32
  }
  func.func @transform_1(%arg0: i32) -> (i32, i32) {
    %c0_i32 = arith.constant 0 : i32
    %c0_i32_0 = arith.constant 0 : i32
    %c0_i32_1 = arith.constant 0 : i32
    return %c0_i32, %c0_i32_0 : i32, i32
  }
  func.func @transform_2(%arg0: i32) -> (i32, i32) {
    %c0_i32 = arith.constant 0 : i32
    %c0_i32_0 = arith.constant 0 : i32
    %c0_i32_1 = arith.constant 0 : i32
    return %c0_i32, %c0_i32_0 : i32, i32
  }
  func.func @transform_3(%arg0: i32) -> (i32, i32) {
    %c0_i32 = arith.constant 0 : i32
    %c0_i32_0 = arith.constant 0 : i32
    %c0_i32_1 = arith.constant 0 : i32
    return %c0_i32, %c0_i32_0 : i32, i32
  }
  func.func @transform_4(%arg0: i32) -> (i32, i32) {
    %c0_i32 = arith.constant 0 : i32
    %c0_i32_0 = arith.constant 0 : i32
    %c0_i32_1 = arith.constant 0 : i32
    return %c0_i32, %c0_i32_0 : i32, i32
  }
  func.func @transform_5(%arg0: i32) -> (i32, i32) {
    %c0_i32 = arith.constant 0 : i32
    %c0_i32_0 = arith.constant 0 : i32
    return %arg0, %c0_i32 : i32, i32
  }
}

</mosaic_0001>

<llo_original>
// kernel: tpu_custom_call.1
$region0: #{tpu_custom_call.1}
  #allocation0 [shape = 'u32[]', space=smem, size = 0x4, offset = 0x4, fixed_abs, tag = 'smem constant byte address 0x4 - core index']
  #allocation1 [shape = 'u32[144,128]{1,0:T(1,128)}', space=vmem, size = 0x12000, scoped, tag = 'internal scratch']
  %s0 = inlined_call_operand.hbm [shape: bf16[8,128], index: 0, kind: input, shape index: {}]
  %s1 = inlined_call_operand.hbm [shape: bf16[128,128], index: 1, kind: input, shape index: {}]
  %s2 = inlined_call_operand.vmem [shape: f32[1,128], index: 2, kind: input, shape index: {}]
  %s3 = inlined_call_operand.hbm [shape: bf16[128,128], index: 3, kind: input, shape index: {}]
  %s4 = inlined_call_operand.vmem [shape: f32[1,128], index: 4, kind: input, shape index: {}]
  %s5 = inlined_call_operand.hbm [shape: f32[8,128], index: 5, kind: output, shape index: {}]
  %s6 = sld [smem:[#allocation0]]
  $region42: #{tpu_custom_call.1} parent=0
    _
  %s8 = ssub.s32 1, %s6
  %s9 = scalar_select 0, %s8, %s6
  $region1: #{tpu_custom_call.1} parent=0
    #allocation2 [shape = 'u8[2048]{0}', space=vmem, size = 0x800, scoped, tag = 'input window, operand 0, single buffered']
    #allocation3 [shape = 's32[1]{0}', space=sflag, size = 0x4, scoped, tag = 'scoped memory for tpu_custom_call.1']
    #allocation4 [shape = 's32[1]{0}', space=sflag, size = 0x4, scoped, tag = 'scoped memory for tpu_custom_call.1']
    #allocation5 [shape = 'u8[32768]{0}', space=vmem, size = 0x8000, scoped, tag = 'input window, operand 1, single buffered']
    #allocation6 [shape = 's32[1]{0}', space=sflag, size = 0x4, scoped, tag = 'scoped memory for tpu_custom_call.1']
    #allocation7 [shape = 'u8[32768]{0}', space=vmem, size = 0x8000, scoped, tag = 'input window, operand 3, single buffered']
    #allocation8 [shape = 'u8[4096]{0}', space=vmem, size = 0x1000, scoped, tag = 'output window, operand 0, single buffered']
    %10 = vsyncpa [#allocation3], 0
    %11 = vsyncpa [#allocation6], 0
    %12 = vsyncpa [#allocation4], 0
    // Predicated region
    $region2: #{tpu_custom_call.1} parent=1 // pred_check
      _
    $region3: #{tpu_custom_call.1} parent=1 // pred_check_branch
      %14 = sbr.rel (0) target = $region5
    $region4: #{tpu_custom_call.1} parent=1 // pred_region
      %s16 = ssub.s32 64, 64
      %17 = vsyncadd [#allocation3], %s16
      %s19 = sshll.u32 [#allocation2], 4
      %s20 = int_to_ptr.vmem [resolvable:$true] %s19
      %22 = dma.hbm_to_vmem [thread:$0]  %s0, 64, %s20, [#allocation3]
    $region5: #{tpu_custom_call.1} parent=1 // pred_fallthru
      _
    // Predicated region
    $region6: #{tpu_custom_call.1} parent=1 // pred_check
      _
    $region7: #{tpu_custom_call.1} parent=1 // pred_check_branch
      %24 = sbr.rel (0) target = $region9
    $region8: #{tpu_custom_call.1} parent=1 // pred_region
      %s26 = ssub.s32 1024, 1024
      %27 = vsyncadd [#allocation6], %s26
      %s28 = sshll.u32 [#allocation5], 4
      %s29 = int_to_ptr.vmem [resolvable:$true] %s28
      %34 = dma.hbm_to_vmem [thread:$0]  %s1, 1024, %s29, [#allocation6], 64, 64, 4
    $region9: #{tpu_custom_call.1} parent=1 // pred_fallthru
      _
    // Predicated region
    $region10: #{tpu_custom_call.1} parent=1 // pred_check
      _
    $region11: #{tpu_custom_call.1} parent=1 // pred_check_branch
      %36 = sbr.rel (0) target = $region13
    $region12: #{tpu_custom_call.1} parent=1 // pred_region
      _
    $region13: #{tpu_custom_call.1} parent=1 // pred_fallthru
      _
    // Predicated region
    $region14: #{tpu_custom_call.1} parent=1 // pred_check
      _
    $region15: #{tpu_custom_call.1} parent=1 // pred_check_branch
      %38 = sbr.rel (0) target = $region17
    $region16: #{tpu_custom_call.1} parent=1 // pred_region
      %s40 = ssub.s32 1024, 1024
      %41 = vsyncadd [#allocation6], %s40
      %s42 = sshll.u32 [#allocation7], 4
      %s43 = int_to_ptr.vmem [resolvable:$true] %s42
      %48 = dma.hbm_to_vmem [thread:$0]  %s3, 1024, %s43, [#allocation6], 64, 64, 4
    $region17: #{tpu_custom_call.1} parent=1 // pred_fallthru
      _
    // Predicated region
    $region18: #{tpu_custom_call.1} parent=1 // pred_check
      _
    $region19: #{tpu_custom_call.1} parent=1 // pred_check_branch
      %50 = sbr.rel (0) target = $region21
    $region20: #{tpu_custom_call.1} parent=1 // pred_region
      _
    $region21: #{tpu_custom_call.1} parent=1 // pred_fallthru
      _
    // Predicated region
    $region22: #{tpu_custom_call.1} parent=1 // pred_check
      _
    $region23: #{tpu_custom_call.1} parent=1 // pred_check_branch
      %52 = sbr.rel (0) target = $region25
    $region24: #{tpu_custom_call.1} parent=1 // pred_region
      %53 = dma.done [#allocation3], 64
    $region25: #{tpu_custom_call.1} parent=1 // pred_fallthru
      _
    // Predicated region
    $region26: #{tpu_custom_call.1} parent=1 // pred_check
      _
    $region27: #{tpu_custom_call.1} parent=1 // pred_check_branch
      %55 = sbr.rel (0) target = $region29
    $region28: #{tpu_custom_call.1} parent=1 // pred_region
      %56 = dma.done [#allocation6], 1024
    $region29: #{tpu_custom_call.1} parent=1 // pred_fallthru
      _
    // Predicated region
    $region30: #{tpu_custom_call.1} parent=1 // pred_check
      _
    $region31: #{tpu_custom_call.1} parent=1 // pred_check_branch
      %58 = sbr.rel (0) target = $region33
    $region32: #{tpu_custom_call.1} parent=1 // pred_region
      %59 = dma.done [#allocation6], 1024
    $region33: #{tpu_custom_call.1} parent=1 // pred_fallthru
      _
    %v61 = vld [vmem:[#allocation2] sm:$0xf]
    %v62 = vld [vmem:[#allocation5] sm:$0xf]
    %v63 = vld [vmem:[#allocation5 + $0x4] sm:$0xf]
    %v64 = vld [vmem:[#allocation5 + $0x8] sm:$0xf]
    %v65 = vld [vmem:[#allocation5 + $0xc] sm:$0xf]
    %v66 = vld [vmem:[#allocation5 + $0x10] sm:$0xf]
    %v67 = vld [vmem:[#allocation5 + $0x14] sm:$0xf]
    %v68 = vld [vmem:[#allocation5 + $0x18] sm:$0xf]
    %v69 = vld [vmem:[#allocation5 + $0x1c] sm:$0xf]
    %v70 = vld [vmem:[#allocation5 + $0x20] sm:$0xf]
    %v71 = vld [vmem:[#allocation5 + $0x24] sm:$0xf]
    %v72 = vld [vmem:[#allocation5 + $0x28] sm:$0xf]
    %v73 = vld [vmem:[#allocation5 + $0x2c] sm:$0xf]
    %v74 = vld [vmem:[#allocation5 + $0x30] sm:$0xf]
    %v75 = vld [vmem:[#allocation5 + $0x34] sm:$0xf]
    %v76 = vld [vmem:[#allocation5 + $0x38] sm:$0xf]
    %v77 = vld [vmem:[#allocation5 + $0x3c] sm:$0xf]
    %v78 = vld [vmem:[%s2] sm:$0x1]
    %v80 = vlaneseq
    %v81 = vshrl.u32 %v80, 7
    %v82 = vsub.s32 0, %v81
    %v83 = vrot.slane %v78, %v82
    %v101 = vunpack.c.l.b16 %v62
    %v102 = vunpack.c.l.b16 %v63
    %v103 = vunpack.c.l.b16 %v64
    %v104 = vunpack.c.l.b16 %v65
    %v105 = vunpack.c.l.b16 %v66
    %v106 = vunpack.c.l.b16 %v67
    %v107 = vunpack.c.l.b16 %v68
    %v108 = vunpack.c.l.b16 %v69
    %v109 = vunpack.c.l.b16 %v70
    %v110 = vunpack.c.l.b16 %v71
    %v111 = vunpack.c.l.b16 %v72
    %v112 = vunpack.c.l.b16 %v73
    %v113 = vunpack.c.l.b16 %v74
    %v114 = vunpack.c.l.b16 %v75
    %v115 = vunpack.c.l.b16 %v76
    %v116 = vunpack.c.l.b16 %v77
    %v117 = vpack.c.b16 %v102, %v101
    %v118 = vpack.c.b16 %v104, %v103
    %v119 = vpack.c.b16 %v106, %v105
    %v120 = vpack.c.b16 %v108, %v107
    %v121 = vpack.c.b16 %v110, %v109
    %v122 = vpack.c.b16 %v112, %v111
    %v123 = vpack.c.b16 %v114, %v113
    %v124 = vpack.c.b16 %v116, %v115
    %133 = vmatprep.subr.bf16.mxu0 0
    %134 = vmatpush1.bf16.msra.mxu0 %v124
    %135 = vmatprep.subr.bf16.mxu0 0
    %136 = vmatpush1.bf16.msra.mxu0 %v123
    %137 = vmatprep.subr.bf16.mxu0 0
    %138 = vmatpush1.bf16.msra.mxu0 %v122
    %139 = vmatprep.subr.bf16.mxu0 0
    %140 = vmatpush1.bf16.msra.mxu0 %v121
    %141 = vmatprep.subr.bf16.mxu0 0
    %142 = vmatpush1.bf16.msra.mxu0 %v120
    %143 = vmatprep.subr.bf16.mxu0 0
    %144 = vmatpush1.bf16.msra.mxu0 %v119
    %145 = vmatprep.subr.bf16.mxu0 0
    %146 = vmatpush1.bf16.msra.mxu0 %v118
    %147 = vmatprep.subr.bf16.mxu0 0
    %148 = vmatpush1.bf16.msra.mxu0 %v117
    %149 = vmatprep.subr.bf16.mxu0 0
    %150 = vmatpush2.bf16.msra.mxu0 0
    %151 = vmatprep.subr.bf16.mxu0 0
    %152 = vmatpush2.bf16.msra.mxu0 0
    %153 = vmatprep.subr.bf16.mxu0 0
    %154 = vmatpush2.bf16.msra.mxu0 0
    %155 = vmatprep.subr.bf16.mxu0 0
    %156 = vmatpush2.bf16.msra.mxu0 0
    %157 = vmatprep.subr.bf16.mxu0 0
    %158 = vmatpush2.bf16.msra.mxu0 0
    %159 = vmatprep.subr.bf16.mxu0 0
    %160 = vmatpush2.bf16.msra.mxu0 0
    %161 = vmatprep.subr.bf16.mxu0 0
    %162 = vmatpush2.bf16.msra.mxu0 0
    %163 = vmatprep.subr.bf16.mxu0 0
    %164 = vmatpush2.bf16.msra.mxu0 0
    %165 = vmatprep.mubr.bf16.mxu0 0
    %166 = vmatmul.mubr.bf16.gmra.mxu0 %v61
    %v167 = vpop.f32.mrf.mxu0
    %v168 = vadd.f32 %v83, %v167
    %v169 = vpop.f32.mrf.mxu0
    %v170 = vpop.f32.mrf.mxu0
    %v171 = vpop.f32.mrf.mxu0
    %172 = vdwg.mxu0
    %v173 = vmax.f32 %v168, 0.0
    %v174 = vpack.c.bf16 %v173, %v173
    %v175 = vld [vmem:[#allocation7] sm:$0xf]
    %v176 = vld [vmem:[#allocation7 + $0x4] sm:$0xf]
    %v177 = vld [vmem:[#allocation7 + $0x8] sm:$0xf]
    %v178 = vld [vmem:[#allocation7 + $0xc] sm:$0xf]
    %v179 = vld [vmem:[#allocation7 + $0x10] sm:$0xf]
    %v180 = vld [vmem:[#allocation7 + $0x14] sm:$0xf]
    %v181 = vld [vmem:[#allocation7 + $0x18] sm:$0xf]
    %v182 = vld [vmem:[#allocation7 + $0x1c] sm:$0xf]
    %v183 = vld [vmem:[#allocation7 + $0x20] sm:$0xf]
    %v184 = vld [vmem:[#allocation7 + $0x24] sm:$0xf]
    %v185 = vld [vmem:[#allocation7 + $0x28] sm:$0xf]
    %v186 = vld [vmem:[#allocation7 + $0x2c] sm:$0xf]
    %v187 = vld [vmem:[#allocation7 + $0x30] sm:$0xf]
    %v188 = vld [vmem:[#allocation7 + $0x34] sm:$0xf]
    %v189 = vld [vmem:[#allocation7 + $0x38] sm:$0xf]
    %v190 = vld [vmem:[#allocation7 + $0x3c] sm:$0xf]
    %v191 = vld [vmem:[%s4] sm:$0x1]
    %v193 = vlaneseq
    %v194 = vshrl.u32 %v193, 7
    %v195 = vsub.s32 0, %v194
    %v196 = vrot.slane %v191, %v195
    %v214 = vunpack.c.l.b16 %v175
    %v215 = vunpack.c.l.b16 %v176
    %v216 = vunpack.c.l.b16 %v177
    %v217 = vunpack.c.l.b16 %v178
    %v218 = vunpack.c.l.b16 %v179
    %v219 = vunpack.c.l.b16 %v180
    %v220 = vunpack.c.l.b16 %v181
    %v221 = vunpack.c.l.b16 %v182
    %v222 = vunpack.c.l.b16 %v183
    %v223 = vunpack.c.l.b16 %v184
    %v224 = vunpack.c.l.b16 %v185
    %v225 = vunpack.c.l.b16 %v186
    %v226 = vunpack.c.l.b16 %v187
    %v227 = vunpack.c.l.b16 %v188
    %v228 = vunpack.c.l.b16 %v189
    %v229 = vunpack.c.l.b16 %v190
    %v230 = vpack.c.b16 %v215, %v214
    %v231 = vpack.c.b16 %v217, %v216
    %v232 = vpack.c.b16 %v219, %v218
    %v233 = vpack.c.b16 %v221, %v220
    %v234 = vpack.c.b16 %v223, %v222
    %v235 = vpack.c.b16 %v225, %v224
    %v236 = vpack.c.b16 %v227, %v226
    %v237 = vpack.c.b16 %v229, %v228
    %246 = vmatprep.subr.bf16.mxu0 0
    %247 = vmatpush1.bf16.msra.mxu0 %v237
    %248 = vmatprep.subr.bf16.mxu0 0
    %249 = vmatpush1.bf16.msra.mxu0 %v236
    %250 = vmatprep.subr.bf16.mxu0 0
    %251 = vmatpush1.bf16.msra.mxu0 %v235
    %252 = vmatprep.subr.bf16.mxu0 0
    %253 = vmatpush1.bf16.msra.mxu0 %v234
    %254 = vmatprep.subr.bf16.mxu0 0
    %255 = vmatpush1.bf16.msra.mxu0 %v233
    %256 = vmatprep.subr.bf16.mxu0 0
    %257 = vmatpush1.bf16.msra.mxu0 %v232
    %258 = vmatprep.subr.bf16.mxu0 0
    %259 = vmatpush1.bf16.msra.mxu0 %v231
    %260 = vmatprep.subr.bf16.mxu0 0
    %261 = vmatpush1.bf16.msra.mxu0 %v230
    %262 = vmatprep.subr.bf16.mxu0 0
    %263 = vmatpush2.bf16.msra.mxu0 0
    %264 = vmatprep.subr.bf16.mxu0 0
    %265 = vmatpush2.bf16.msra.mxu0 0
    %266 = vmatprep.subr.bf16.mxu0 0
    %267 = vmatpush2.bf16.msra.mxu0 0
    %268 = vmatprep.subr.bf16.mxu0 0
    %269 = vmatpush2.bf16.msra.mxu0 0
    %270 = vmatprep.subr.bf16.mxu0 0
    %271 = vmatpush2.bf16.msra.mxu0 0
    %272 = vmatprep.subr.bf16.mxu0 0
    %273 = vmatpush2.bf16.msra.mxu0 0
    %274 = vmatprep.subr.bf16.mxu0 0
    %275 = vmatpush2.bf16.msra.mxu0 0
    %276 = vmatprep.subr.bf16.mxu0 0
    %277 = vmatpush2.bf16.msra.mxu0 0
    %278 = vmatprep.mubr.bf16.mxu0 0
    %279 = vmatmul.mubr.bf16.gmra.mxu0 %v174
    %v280 = vpop.f32.mrf.mxu0
    %v281 = vadd.f32 %v196, %v280
    %v282 = vpop.f32.mrf.mxu0
    %v283 = vpop.f32.mrf.mxu0
    %v284 = vpop.f32.mrf.mxu0
    %285 = vdwg.mxu0
    %v286 = vlaneseq
    %v287 = vand.u32 %v286, 127
    %vm288 = vcmp.lt.s32.totalorder %v287, 4
    %v289 = vsel %vm288, %v281, -1e+30
    %290 = vmax.xlane.f32.xlu0 %v289
    %v291 = vpop.xlane.xlu0 %290
    %v292 = vsub.f32 %v289, %v291
    %v293 = vmul.f32 %v292, 1.442695
    %v294 = vpow.pop %v293
    %295 = vadd.xlane.f32.xlu0 %v294
    %v296 = vpop.xlane.xlu0 %295
    %v297 = vrcp.pop %v296
    %v298 = vmul.f32 %v294, %v297
    %299 = vst [vmem:[#allocation8] sm:$0xff] %v298
    // Predicated region
    $region34: #{tpu_custom_call.1} parent=1 // pred_check
      _
    $region35: #{tpu_custom_call.1} parent=1 // pred_check_branch
      %301 = sbr.rel (0) target = $region37
    $region36: #{tpu_custom_call.1} parent=1 // pred_region
      %s303 = ssub.s32 128, 128
      %304 = vsyncadd [#allocation4], %s303
      %s306 = sshll.u32 [#allocation8], 4
      %s307 = int_to_ptr.vmem [resolvable:$true] %s306
      %309 = dma.vmem_to_hbm [thread:$0]  %s307, 128, %s5, [#allocation4]
    $region37: #{tpu_custom_call.1} parent=1 // pred_fallthru
      _
    // Predicated region
    $region38: #{tpu_custom_call.1} parent=1 // pred_check
      _
    $region39: #{tpu_custom_call.1} parent=1 // pred_check_branch
      %311 = sbr.rel (0) target = $region41
    $region40: #{tpu_custom_call.1} parent=1 // pred_region
      %312 = dma.done [#allocation4], 128
    $region41: #{tpu_custom_call.1} parent=1 // pred_fallthru
      _
    %313 = vsyncpa [#allocation3], 1
    %314 = vsyncpa [#allocation6], 1
    %315 = vsyncpa [#allocation4], 1

</llo_original>
